<compile_context>
chip_gen: v6e
topology: v6e:2x2x1
jax: 0.10.0
libtpu: 0.0.40
codegen_flags: <defaults>
</compile_context>

<pallas_src>
import jax
import jax.numpy as jnp
from jax.experimental import pallas as pl
from jax.experimental.pallas import tpu as pltpu

HIDDEN_DIM = 500   # matches the PyTorch script's hidden_dim (default branch)


def _round_up(x, m):
    return -(-x // m) * m


def _cdiv(a, b):
    return -(-a // b)


def mlp_kernel(x_ref, w1a_ref, w2p_ref, b2_ref, o_ref):
    # x_ref:   [Bt, 8] f32, columns = [x0, x1, 1, 0, 0, 0, 0, 0]
    # w1a_ref: [8, Hp] bf16, rows = [W1[0], W1[1], b1, 0, ...]  (bias folded via ones col)
    # w2p_ref: [Hp, 8] bf16, cols 0..1 = W2, rest zero
    # b2_ref:  [1, 8]  f32, cols 0..1 = b2, rest zero
    # o_ref:   [Bt, 8] f32
    xa = x_ref[...].astype(jnp.bfloat16)
    # fc1 (+ b1) on the MXU; f32 accumulation.
    h = jnp.dot(xa, w1a_ref[...], preferred_element_type=jnp.float32)
    # Only the ReLU (and the bf16 recast) stays on the VPU.
    h = jnp.maximum(h, 0.0).astype(jnp.bfloat16)
    # fc2 on the MXU, narrow (8-lane) output; f32 accumulation.
    o = jnp.dot(h, w2p_ref[...], preferred_element_type=jnp.float32)
    o_ref[...] = (o + b2_ref[...]).astype(o_ref.dtype)


def pack_params(w1, b1, w2, b2):
    """Pack weights ONCE (amortize across forward calls — hoisted per review).

    Returns:
      w1a: [8, Hp]  bf16 — rows 0/1 = W1 rows, row 2 = b1, rows 3..7 zero.
      w2p: [Hp, 8]  bf16 — cols 0/1 = W2, rest zero.
      b2p: [1, 8]   f32  — cols 0/1 = b2, rest zero.
    """
    H = w1.shape[1]
    Hp = _round_up(H, 128)
    w1a = jnp.zeros((8, Hp), jnp.float32)
    w1a = w1a.at[0:2, :H].set(w1.astype(jnp.float32))
    w1a = w1a.at[2, :H].set(b1.astype(jnp.float32))
    w2p = jnp.zeros((Hp, 8), jnp.float32)
    w2p = w2p.at[:H, 0:2].set(w2.astype(jnp.float32))
    b2p = jnp.zeros((1, 8), jnp.float32).at[0, 0:2].set(b2.astype(jnp.float32))
    return w1a.astype(jnp.bfloat16), w2p.astype(jnp.bfloat16), b2p


def _choose_tiles(B, block_b):
    """Pick (padded batch, batch tile): tiles of >=8 rows, >=2 grid steps when
    possible (so the 'parallel' axis shards across v7x's 2 TensorCores)."""
    Bp = _round_up(max(B, 8), 8)
    n_tiles = max(_cdiv(Bp, block_b), 2 if Bp >= 16 else 1)
    Bt = _round_up(_cdiv(Bp, n_tiles), 8)
    Bp = _round_up(Bp, Bt)
    return Bp, Bt


def net_forward(x, w1a, w2p, b2p, *, block_b=2048):
    """x: [B, 2] f32; packed params from pack_params() -> [B, 2] f32."""
    B = x.shape[0]
    Hp = w1a.shape[1]
    Bp, Bt = _choose_tiles(B, block_b)
    n_tiles = Bp // Bt

    # Augmented input: [x0, x1, 1, 0...0] so fc1's bias rides the MXU matmul.
    xa = jnp.zeros((Bp, 8), jnp.float32)
    xa = xa.at[:B, 0:2].set(x.astype(jnp.float32))
    xa = xa.at[:, 2].set(1.0)

    flops = 2 * Bp * 8 * Hp + 2 * Bp * Hp * 8
    bytes_accessed = (xa.size + b2p.size + Bp * 8) * 4 + (w1a.size + w2p.size) * 2

    out = pl.pallas_call(
        mlp_kernel,
        out_shape=jax.ShapeDtypeStruct((Bp, 8), jnp.float32),
        grid=(n_tiles,),
        in_specs=[
            pl.BlockSpec((Bt, 8), lambda i: (i, 0)),    # per-tile batch block
            pl.BlockSpec((8, Hp), lambda i: (0, 0)),    # packed W1/b1, VMEM-resident
            pl.BlockSpec((Hp, 8), lambda i: (0, 0)),    # padded W2, VMEM-resident
            pl.BlockSpec((1, 8), lambda i: (0, 0)),     # padded b2, VMEM-resident
        ],
        out_specs=pl.BlockSpec((Bt, 8), lambda i: (i, 0)),   # narrow (8-lane) writeback
        compiler_params=pltpu.CompilerParams(
            dimension_semantics=("parallel",),
            vmem_limit_bytes=32 * 1024 * 1024),
        cost_estimate=pl.CostEstimate(
            flops=flops, transcendentals=0, bytes_accessed=bytes_accessed),
    )(xa, w1a, w2p, b2p)
    return out[:B, :2]


def init_params(key, hidden_dim):
    """Deterministic init mimicking PyTorch's default Linear init (U(-k, k), k=1/sqrt(fan_in))."""
    k1, k2, k3, k4 = jax.random.split(key, 4)
    bound1 = 1.0 / jnp.sqrt(2.0)
    w1 = jax.random.uniform(k1, (2, hidden_dim), jnp.float32, -bound1, bound1)
    b1 = jax.random.uniform(k2, (hidden_dim,), jnp.float32, -bound1, bound1)
    bound2 = 1.0 / jnp.sqrt(float(hidden_dim))
    w2 = jax.random.uniform(k3, (hidden_dim, 2), jnp.float32, -bound2, bound2)
    b2 = jax.random.uniform(k4, (2,), jnp.float32, -bound2, bound2)
    return w1, b1, w2, b2


if __name__ == "__main__":
    key = jax.random.PRNGKey(0)
    kx, kp = jax.random.split(key)

    batch = 64   # small, but >= 16 so the batch grid has 2 tiles (exercises the parallel axis)
    x = jax.random.normal(kx, (batch, 2), dtype=jnp.float32)
    w1, b1, w2, b2 = init_params(kp, HIDDEN_DIM)

    w1a, w2p, b2p = pack_params(w1, b1, w2, b2)          # packed once, reused every call
    fwd = jax.jit(net_forward)
    out = jax.block_until_ready(fwd(x, w1a, w2p, b2p))

    # Pure-JAX f32 reference of the PyTorch forward.
    ref_f32 = jnp.maximum(x @ w1 + b1, 0.0) @ w2 + b2
    # Matched-precision reference (bf16 operands, f32 accumulation) — validates the
    # kernel exactly; the f32 comparison below uses a loosened tolerance because the
    # bf16 MXU inputs are an intentional precision trade (per review).
    h_ref = jnp.maximum(
        jnp.dot(x.astype(jnp.bfloat16), w1.astype(jnp.bfloat16),
                preferred_element_type=jnp.float32)
        + b1.astype(jnp.bfloat16).astype(jnp.float32), 0.0)
    ref_bf16 = jnp.dot(h_ref.astype(jnp.bfloat16), w2.astype(jnp.bfloat16),
                       preferred_element_type=jnp.float32) + b2

    assert out.shape == (batch, 2)
    assert jnp.allclose(out, ref_bf16, atol=2e-3, rtol=2e-3), "mismatch vs matched-precision ref"
    assert jnp.allclose(out, ref_f32, atol=5e-2, rtol=5e-2), "mismatch vs f32 ref"

    print("KERNEL_OK")
</pallas_src>

<mosaic_0001>
module attributes {stable_mosaic.version = 11 : i64} {
  func.func @mlp_kernel(%arg0: i32, %arg1: memref<32x8xf32, #tpu.memory_space<vmem>>, %arg2: memref<8x512xbf16, #tpu.memory_space<vmem>>, %arg3: memref<512x8xbf16, #tpu.memory_space<vmem>>, %arg4: memref<1x8xf32, #tpu.memory_space<vmem>>, %arg5: memref<32x8xf32, #tpu.memory_space<vmem>>) attributes {dimension_semantics = [#tpu.dimension_semantics<parallel>], iteration_bounds = array<i64: 2>, scalar_prefetch = 0 : i64, scratch_operands = 0 : i64, tpu.core_type = #tpu.core_type<tc>, window_params = [{transform_indices = @transform_0, window_bounds = array<i64: 32, 8>}, {pipeline_mode = #tpu.pipeline_mode<synchronous>, transform_indices = @transform_1, window_bounds = array<i64: 8, 512>}, {pipeline_mode = #tpu.pipeline_mode<synchronous>, transform_indices = @transform_2, window_bounds = array<i64: 512, 8>}, {pipeline_mode = #tpu.pipeline_mode<synchronous>, transform_indices = @transform_3, window_bounds = array<i64: 1, 8>}, {transform_indices = @transform_4, window_bounds = array<i64: 32, 8>}]} {
    %c0 = arith.constant 0 : index
    %c0_0 = arith.constant 0 : index
    %0 = vector.load %arg1[%c0, %c0_0] : memref<32x8xf32, #tpu.memory_space<vmem>>, vector<32x8xf32>
    %1 = arith.truncf %0 : vector<32x8xf32> to vector<32x8xbf16>
    %c0_1 = arith.constant 0 : index
    %c0_2 = arith.constant 0 : index
    %2 = vector.load %arg2[%c0_1, %c0_2] : memref<8x512xbf16, #tpu.memory_space<vmem>>, vector<8x512xbf16>
    %cst = arith.constant dense<0.000000e+00> : vector<32x512xf32>
    %3 = tpu.matmul %1, %2, %cst {dimension_numbers = #tpu.dot_dimension_numbers<[1], [0], [0], [1], [0, 0, 1, 1], [], []>} : vector<32x8xbf16>, vector<8x512xbf16>, vector<32x512xf32> -> vector<32x512xf32>
    %cst_3 = arith.constant 0.000000e+00 : f32
    %4 = vector.broadcast %cst_3 : f32 to vector<32x512xf32>
    %5 = arith.maximumf %3, %4 : vector<32x512xf32>
    %6 = arith.truncf %5 : vector<32x512xf32> to vector<32x512xbf16>
    %c0_4 = arith.constant 0 : index
    %c0_5 = arith.constant 0 : index
    %7 = vector.load %arg3[%c0_4, %c0_5] : memref<512x8xbf16, #tpu.memory_space<vmem>>, vector<512x8xbf16>
    %cst_6 = arith.constant dense<0.000000e+00> : vector<32x8xf32>
    %8 = tpu.matmul %6, %7, %cst_6 {dimension_numbers = #tpu.dot_dimension_numbers<[1], [0], [0], [1], [0, 0, 1, 1], [], []>} : vector<32x512xbf16>, vector<512x8xbf16>, vector<32x8xf32> -> vector<32x8xf32>
    %c0_7 = arith.constant 0 : index
    %c0_8 = arith.constant 0 : index
    %9 = vector.load %arg4[%c0_7, %c0_8] : memref<1x8xf32, #tpu.memory_space<vmem>>, vector<1x8xf32>
    %10 = vector.broadcast %9 : vector<1x8xf32> to vector<32x8xf32>
    %11 = arith.addf %8, %10 : vector<32x8xf32>
    %c0_9 = arith.constant 0 : index
    %c0_10 = arith.constant 0 : index
    %12 = vector.load %arg5[%c0_9, %c0_10] : memref<32x8xf32, #tpu.memory_space<vmem>>, vector<32x8xf32>
    tpu.vector_store %arg5[%c0_9, %c0_10], %11 {strides = array<i32>} : memref<32x8xf32, #tpu.memory_space<vmem>>, vector<32x8xf32>,
    return
  }
  func.func @transform_0(%arg0: i32) -> (i32, i32) {
    %c0_i32 = arith.constant 0 : i32
    %c0_i32_0 = arith.constant 0 : i32
    return %arg0, %c0_i32 : i32, i32
  }
  func.func @transform_1(%arg0: i32) -> (i32, i32) {
    %c0_i32 = arith.constant 0 : i32
    %c0_i32_0 = arith.constant 0 : i32
    %c0_i32_1 = arith.constant 0 : i32
    return %c0_i32, %c0_i32_0 : i32, i32
  }
  func.func @transform_2(%arg0: i32) -> (i32, i32) {
    %c0_i32 = arith.constant 0 : i32
    %c0_i32_0 = arith.constant 0 : i32
    %c0_i32_1 = arith.constant 0 : i32
    return %c0_i32, %c0_i32_0 : i32, i32
  }
  func.func @transform_3(%arg0: i32) -> (i32, i32) {
    %c0_i32 = arith.constant 0 : i32
    %c0_i32_0 = arith.constant 0 : i32
    %c0_i32_1 = arith.constant 0 : i32
    return %c0_i32, %c0_i32_0 : i32, i32
  }
  func.func @transform_4(%arg0: i32) -> (i32, i32) {
    %c0_i32 = arith.constant 0 : i32
    %c0_i32_0 = arith.constant 0 : i32
    return %arg0, %c0_i32 : i32, i32
  }
}

</mosaic_0001>

<llo_original>
// kernel: net_forward.1
$region0: #{net_forward.1}
  #allocation0 [shape = 'u32[]', space=smem, size = 0x4, offset = 0x4, fixed_abs, tag = 'smem constant byte address 0x4 - core index']
  #allocation1 [shape = 'u32[144,128]{1,0:T(1,128)}', space=vmem, size = 0x12000, scoped, tag = 'internal scratch']
  %s0 = inlined_call_operand.vmem [shape: f32[64,8], index: 0, kind: input, shape index: {}]
  %s1 = inlined_call_operand.vmem [shape: bf16[8,512], index: 1, kind: input, shape index: {}]
  %s2 = inlined_call_operand.vmem [shape: bf16[512,8], index: 2, kind: input, shape index: {}]
  %s3 = inlined_call_operand.vmem [shape: f32[1,8], index: 3, kind: input, shape index: {}]
  %s4 = inlined_call_operand.vmem [shape: f32[64,8], index: 4, kind: output, shape index: {}]
  %s5 = sld [smem:[#allocation0]]
  $region49: #{net_forward.1} parent=0
    _
  %s7 = ssub.s32 1, %s5
  %s8 = scalar_select 0, %s7, %s5
  loop: start=0, step=1, limit=4
  $region2: #{net_forward.1} parent=0 // loop_pre_header
    _
  $region3: #{net_forward.1} parent=0 // loop_header
    %s10 = sphi 0, %s14
    %p11 = scmp.ge.s32.totalorder %s10, 4
    %s20 = sphi 0, %s22
    %s23 = sphi 0, %s20
    %s24 = sphi 0, %s23
    %s40 = sphi 0, %s24
    %s44 = sphi 0, %s44
    %s46 = sphi 0, %s44
    %s47 = sphi 0, %s46
    %s61 = sphi 0, %s47
    %s65 = sphi 0, %s65
    %s67 = sphi 0, %s65
    %s68 = sphi 0, %s67
    %s82 = sphi 0, %s68
    %s86 = sphi 0, %s86
    %s88 = sphi 0, %s86
    %s89 = sphi 0, %s88
    %s103 = sphi 0, %s89
    %s109 = sphi 0, %s111
    %s112 = sphi 0, %s109
    %s113 = sphi 0, %s112
    %s129 = sphi 0, %s113
  $region4: #{net_forward.1} parent=0 // loop_header_branch
    %13 = sbr.rel (%p11) target = $region8
  $region5: #{net_forward.1} parent=0 // loop_body
    %s15 = ssub.s32 %s10, 1
    %s16 = ssub.s32 %s10, 2
    %s17 = sadd.s32 %s10, 1
    %s18 = ssub.s32 %s10, %s17
    %p19 = scmp.eq.s32.totalorder %s18, 0
    %s21 = sadd.s32 %s20, 1
    %s22 = scalar_select %p19, %s20, %s21
    %p25 = pneg %p19
    %p26 = scmp.eq.s32.totalorder %s10, 1
    %p27 = por %p25, %p26
    %p28 = scmp.ne.s32.totalorder %s20, %s23
    %p29 = scmp.eq.s32.totalorder %s10, 0
    %p30 = por %p28, %p29
    %p31 = scmp.ne.s32.totalorder %s20, %s23
    %p32 = scmp.eq.s32.totalorder %s15, 1
    %p33 = por %p31, %p32
    %p34 = scmp.ne.s32.totalorder %s23, %s24
    %p35 = scmp.eq.s32.totalorder %s15, 0
    %p36 = por %p34, %p35
    %p37 = scmp.ne.s32.totalorder %s23, %s24
    %p38 = scmp.eq.s32.totalorder %s16, 1
    %p39 = por %p37, %p38
    %p41 = scmp.ne.s32.totalorder %s24, %s40
    %p42 = scmp.eq.s32.totalorder %s16, 0
    %p43 = por %p41, %p42
    %s45 = sadd.s32 %s44, 1
    %p48 = scmp.eq.s32.totalorder %s10, 1
    %p49 = scmp.ne.s32.totalorder %s44, %s46
    %p50 = scmp.eq.s32.totalorder %s10, 0
    %p51 = por %p49, %p50
    %p52 = scmp.ne.s32.totalorder %s44, %s46
    %p53 = scmp.eq.s32.totalorder %s15, 1
    %p54 = por %p52, %p53
    %p55 = scmp.ne.s32.totalorder %s46, %s47
    %p56 = scmp.eq.s32.totalorder %s15, 0
    %p57 = por %p55, %p56
    %p58 = scmp.ne.s32.totalorder %s46, %s47
    %p59 = scmp.eq.s32.totalorder %s16, 1
    %p60 = por %p58, %p59
    %p62 = scmp.ne.s32.totalorder %s47, %s61
    %p63 = scmp.eq.s32.totalorder %s16, 0
    %p64 = por %p62, %p63
    %s66 = sadd.s32 %s65, 1
    %p69 = scmp.eq.s32.totalorder %s10, 1
    %p70 = scmp.ne.s32.totalorder %s65, %s67
    %p71 = scmp.eq.s32.totalorder %s10, 0
    %p72 = por %p70, %p71
    %p73 = scmp.ne.s32.totalorder %s65, %s67
    %p74 = scmp.eq.s32.totalorder %s15, 1
    %p75 = por %p73, %p74
    %p76 = scmp.ne.s32.totalorder %s67, %s68
    %p77 = scmp.eq.s32.totalorder %s15, 0
    %p78 = por %p76, %p77
    %p79 = scmp.ne.s32.totalorder %s67, %s68
    %p80 = scmp.eq.s32.totalorder %s16, 1
    %p81 = por %p79, %p80
    %p83 = scmp.ne.s32.totalorder %s68, %s82
    %p84 = scmp.eq.s32.totalorder %s16, 0
    %p85 = por %p83, %p84
    %s87 = sadd.s32 %s86, 1
    %p90 = scmp.eq.s32.totalorder %s10, 1
    %p91 = scmp.ne.s32.totalorder %s86, %s88
    %p92 = scmp.eq.s32.totalorder %s10, 0
    %p93 = por %p91, %p92
    %p94 = scmp.ne.s32.totalorder %s86, %s88
    %p95 = scmp.eq.s32.totalorder %s15, 1
    %p96 = por %p94, %p95
    %p97 = scmp.ne.s32.totalorder %s88, %s89
    %p98 = scmp.eq.s32.totalorder %s15, 0
    %p99 = por %p97, %p98
    %p100 = scmp.ne.s32.totalorder %s88, %s89
    %p101 = scmp.eq.s32.totalorder %s16, 1
    %p102 = por %p100, %p101
    %p104 = scmp.ne.s32.totalorder %s89, %s103
    %p105 = scmp.eq.s32.totalorder %s16, 0
    %p106 = por %p104, %p105
    %s107 = ssub.s32 %s10, %s17
    %p108 = scmp.eq.s32.totalorder %s107, 0
    %s110 = sadd.s32 %s109, 1
    %s111 = scalar_select %p108, %s109, %s110
    %p114 = pneg %p108
    %p115 = scmp.eq.s32.totalorder %s10, 1
    %p116 = por %p114, %p115
    %p117 = scmp.ne.s32.totalorder %s109, %s112
    %p118 = scmp.eq.s32.totalorder %s10, 0
    %p119 = por %p117, %p118
    %p120 = scmp.ne.s32.totalorder %s109, %s112
    %p121 = scmp.eq.s32.totalorder %s15, 1
    %p122 = por %p120, %p121
    %p123 = scmp.ne.s32.totalorder %s112, %s113
    %p124 = scmp.eq.s32.totalorder %s15, 0
    %p125 = por %p123, %p124
    %p126 = scmp.ne.s32.totalorder %s112, %s113
    %p127 = scmp.eq.s32.totalorder %s16, 1
    %p128 = por %p126, %p127
    %p130 = scmp.ne.s32.totalorder %s113, %s129
    %p131 = scmp.eq.s32.totalorder %s16, 0
    %p132 = por %p130, %p131
    %p133 = scmp.le.s32.totalorder 1, %s10
    %p134 = scmp.lt.s32.totalorder %s10, 3
    %p135 = pnand %p133, %p134
    %p136 = pneg %p135
    // Predicated region
    $region9: #{net_forward.1} parent=5 // pred_check
      _
    $region10: #{net_forward.1} parent=5 // pred_check_branch
      %138 = sbr.rel (%p135) target = $region12
    $region11: #{net_forward.1} parent=5 // pred_region
      %s139 = ssub.s32 %s10, 1
      // Predicated region
      $region13: #{net_forward.1} parent=11 // pred_check
        %p140 = pneg %p57
      $region14: #{net_forward.1} parent=11 // pred_check_branch
        %142 = sbr.rel (%p140) target = $region16
      $region15: #{net_forward.1} parent=11 // pred_region
        _
      $region16: #{net_forward.1} parent=11 // pred_fallthru
        _
      // Predicated region
      $region17: #{net_forward.1} parent=11 // pred_check
        %p143 = pneg %p78
      $region18: #{net_forward.1} parent=11 // pred_check_branch
        %145 = sbr.rel (%p143) target = $region20
      $region19: #{net_forward.1} parent=11 // pred_region
        _
      $region20: #{net_forward.1} parent=11 // pred_fallthru
        _
      // Predicated region
      $region21: #{net_forward.1} parent=11 // pred_check
        %p146 = pneg %p99
      $region22: #{net_forward.1} parent=11 // pred_check_branch
        %148 = sbr.rel (%p146) target = $region24
      $region23: #{net_forward.1} parent=11 // pred_region
        _
      $region24: #{net_forward.1} parent=11 // pred_fallthru
        _
    $region12: #{net_forward.1} parent=5 // pred_fallthru
      _
    %p149 = scmp.lt.s32.totalorder %s10, 2
    // Predicated region
    $region25: #{net_forward.1} parent=5 // pred_check
      %p150 = pneg %p149
    $region26: #{net_forward.1} parent=5 // pred_check_branch
      %152 = sbr.rel (%p150) target = $region28
    $region27: #{net_forward.1} parent=5 // pred_region
      // Predicated region
      $region29: #{net_forward.1} parent=27 // pred_check
        %p153 = pneg %p30
      $region30: #{net_forward.1} parent=27 // pred_check_branch
        %155 = sbr.rel (%p153) target = $region32
      $region31: #{net_forward.1} parent=27 // pred_region
        %s156 = smul.u32 4, %s10
        %p157 = scmp.lt.s32.totalorder %s156, 7
        %s158 = scalar_select %p157, %s156, 7
        %s159 = smul.addr %s158, 8
        %s160 = scalar_lea.vmem %s0, %s159
        %s161 = smul.u32 4, %s10
      $region32: #{net_forward.1} parent=27 // pred_fallthru
        _
    $region28: #{net_forward.1} parent=5 // pred_fallthru
      _
    %p162 = scmp.le.s32.totalorder 1, %s10
    %p163 = scmp.lt.s32.totalorder %s10, 3
    %p164 = pnand %p162, %p163
    %p165 = pneg %p164
    // Predicated region
    $region33: #{net_forward.1} parent=5 // pred_check
      _
    $region34: #{net_forward.1} parent=5 // pred_check_branch
      %167 = sbr.rel (%p164) target = $region36
    $region35: #{net_forward.1} parent=5 // pred_region
      %s168 = ssub.s32 %s10, 1
      %s169 = smul.u32 4, %s15
      %p170 = scmp.lt.s32.totalorder %s169, 7
      %s171 = scalar_select %p170, %s169, 7
      %s172 = smul.addr %s171, 8
      %s173 = scalar_lea.vmem %s0, %s172
      %p174 = pneg %p36
      %p175 = pneg %p33
      %p176 = pneg %p57
      %p177 = pneg %p54
      %p178 = pneg %p78
      %p179 = pneg %p75
      %p180 = pneg %p99
      %p181 = pneg %p96
      %p182 = pneg %p125
      %p183 = pneg %p122
      %s184 = smul.u32 4, %s15
      %p185 = scmp.lt.s32.totalorder %s184, 7
      %s186 = scalar_select %p185, %s184, 7
      %s187 = smul.addr %s186, 8
      %s188 = scalar_lea.vmem %s4, %s187
      %s189 = smul.u32 4, %s15
      %p190 = scmp.lt.s32.totalorder %s189, 7
      %s191 = scalar_select %p190, %s189, 7
      %s192 = smul.addr %s191, 8
      %s193 = scalar_lea.vmem %s0, %s192
      %s194 = smul.u32 4, %s15
      %s195 = smul.u32 4, %s15
      %p196 = scmp.lt.s32.totalorder %s195, 7
      %s197 = scalar_select %p196, %s195, 7
      %s198 = smul.addr %s197, 8
      %s199 = scalar_lea.vmem %s4, %s198
      %s200 = smul.u32 4, %s15
      %v202 = vld [vmem:[%s193] sm:$0xff]
      %v203 = vld [vmem:[%s193 + $0x8] sm:$0xff]
      %v204 = vld [vmem:[%s193 + $0x10] sm:$0xff]
      %v205 = vld [vmem:[%s193 + $0x18] sm:$0xff]
      %v206 = vpack.c.bf16 %v203, %v202
      %v207 = vpack.c.bf16 %v205, %v204
      %v208 = vld [vmem:[%s1] sm:$0xff]
      %v209 = vld [vmem:[%s1 + $0x8] sm:$0xff]
      %v212 = vunpack.c.l.b16 %v208
      %v213 = vunpack.c.h.b16 %v208
      %v214 = vunpack.c.l.b16 %v209
      %v215 = vunpack.c.h.b16 %v209
      %v216 = vpack.c.b16 %v212, %v212
      %v217 = vpack.c.b16 %v213, %v213
      %v218 = vpack.c.b16 %v214, %v214
      %v219 = vpack.c.b16 %v215, %v215
      %vm220 = vcmask 64512
      %v222 = vsel %vm220, %v206, 0
      %v225 = vsel %vm220, %v207, 0
      %vm227 = vcmask 1043456
      %v229 = vsel %vm227, %v216, 0
      %v232 = vsel %vm227, %v217, 0
      %v235 = vsel %vm227, %v218, 0
      %v238 = vsel %vm227, %v219, 0
      %240 = vmatprep.subr.bf16.mxu0 0
      %241 = vmatpush1.bf16.msra.mxu0 0
      %242 = vmatprep.subr.bf16.mxu0 0
      %243 = vmatpush1.bf16.msra.mxu0 0
      %244 = vmatprep.subr.bf16.mxu0 0
      %245 = vmatpush1.bf16.msra.mxu0 0
      %246 = vmatprep.subr.bf16.mxu0 0
      %247 = vmatpush1.bf16.msra.mxu0 0
      %248 = vmatprep.subr.bf16.mxu0 0
      %249 = vmatpush1.bf16.msra.mxu0 0
      %250 = vmatprep.subr.bf16.mxu0 0
      %251 = vmatpush1.bf16.msra.mxu0 0
      %252 = vmatprep.subr.bf16.mxu0 0
      %253 = vmatpush1.bf16.msra.mxu0 0
      %254 = vmatprep.subr.bf16.mxu0 %v232
      %255 = vmatpush1.bf16.msra.mxu0 %v229
      %256 = vmatprep.subr.bf16.mxu0 0
      %257 = vmatpush2.bf16.msra.mxu0 0
      %258 = vmatprep.subr.bf16.mxu0 0
      %259 = vmatpush2.bf16.msra.mxu0 0
      %260 = vmatprep.subr.bf16.mxu0 0
      %261 = vmatpush2.bf16.msra.mxu0 0
      %262 = vmatprep.subr.bf16.mxu0 0
      %263 = vmatpush2.bf16.msra.mxu0 0
      %264 = vmatprep.subr.bf16.mxu0 0
      %265 = vmatpush2.bf16.msra.mxu0 0
      %266 = vmatprep.subr.bf16.mxu0 0
      %267 = vmatpush2.bf16.msra.mxu0 0
      %268 = vmatprep.subr.bf16.mxu0 0
      %269 = vmatpush2.bf16.msra.mxu0 0
      %270 = vmatprep.subr.bf16.mxu0 0
      %271 = vmatpush2.bf16.msra.mxu0 0
      %272 = vmatprep.mubr.bf16.mxu0 0
      %273 = vmatmul.mubr.bf16.gmra.mxu0 %v222
      %v274 = vpop.f32.mrf.mxu0
      %v275 = vadd.f32 0.0, %v274
      %v276 = vpop.f32.mrf.mxu0
      %v277 = vadd.f32 0.0, %v276
      %v278 = vpop.f32.mrf.mxu0
      %v279 = vadd.f32 0.0, %v278
      %v280 = vpop.f32.mrf.mxu0
      %v281 = vadd.f32 0.0, %v280
      %282 = vmatprep.mubr.bf16.mxu0 0
      %283 = vmatmul.mubr.bf16.gmra.mxu0 %v225
      %v284 = vpop.f32.mrf.mxu0
      %v285 = vadd.f32 0.0, %v284
      %v286 = vpop.f32.mrf.mxu0
      %v287 = vadd.f32 0.0, %v286
      %v288 = vpop.f32.mrf.mxu0
      %v289 = vadd.f32 0.0, %v288
      %v290 = vpop.f32.mrf.mxu0
      %v291 = vadd.f32 0.0, %v290
      %292 = vdwg.mxu0
      %293 = vmatprep.subr.bf16.mxu0 0
      %294 = vmatpush1.bf16.msra.mxu0 0
      %295 = vmatprep.subr.bf16.mxu0 0
      %296 = vmatpush1.bf16.msra.mxu0 0
      %297 = vmatprep.subr.bf16.mxu0 0
      %298 = vmatpush1.bf16.msra.mxu0 0
      %299 = vmatprep.subr.bf16.mxu0 0
      %300 = vmatpush1.bf16.msra.mxu0 0
      %301 = vmatprep.subr.bf16.mxu0 0
      %302 = vmatpush1.bf16.msra.mxu0 0
      %303 = vmatprep.subr.bf16.mxu0 0
      %304 = vmatpush1.bf16.msra.mxu0 0
      %305 = vmatprep.subr.bf16.mxu0 0
      %306 = vmatpush1.bf16.msra.mxu0 0
      %307 = vmatprep.subr.bf16.mxu0 %v238
      %308 = vmatpush1.bf16.msra.mxu0 %v235
      %309 = vmatprep.subr.bf16.mxu0 0
      %310 = vmatpush2.bf16.msra.mxu0 0
      %311 = vmatprep.subr.bf16.mxu0 0
      %312 = vmatpush2.bf16.msra.mxu0 0
      %313 = vmatprep.subr.bf16.mxu0 0
      %314 = vmatpush2.bf16.msra.mxu0 0
      %315 = vmatprep.subr.bf16.mxu0 0
      %316 = vmatpush2.bf16.msra.mxu0 0
      %317 = vmatprep.subr.bf16.mxu0 0
      %318 = vmatpush2.bf16.msra.mxu0 0
      %319 = vmatprep.subr.bf16.mxu0 0
      %320 = vmatpush2.bf16.msra.mxu0 0
      %321 = vmatprep.subr.bf16.mxu0 0
      %322 = vmatpush2.bf16.msra.mxu0 0
      %323 = vmatprep.subr.bf16.mxu0 0
      %324 = vmatpush2.bf16.msra.mxu0 0
      %325 = vmatprep.mubr.bf16.mxu0 0
      %326 = vmatmul.mubr.bf16.gmra.mxu0 %v222
      %v327 = vpop.f32.mrf.mxu0
      %v328 = vadd.f32 0.0, %v327
      %v329 = vpop.f32.mrf.mxu0
      %v330 = vadd.f32 0.0, %v329
      %v331 = vpop.f32.mrf.mxu0
      %v332 = vadd.f32 0.0, %v331
      %v333 = vpop.f32.mrf.mxu0
      %v334 = vadd.f32 0.0, %v333
      %335 = vmatprep.mubr.bf16.mxu0 0
      %336 = vmatmul.mubr.bf16.gmra.mxu0 %v225
      %v337 = vpop.f32.mrf.mxu0
      %v338 = vadd.f32 0.0, %v337
      %v339 = vpop.f32.mrf.mxu0
      %v340 = vadd.f32 0.0, %v339
      %v341 = vpop.f32.mrf.mxu0
      %v342 = vadd.f32 0.0, %v341
      %v343 = vpop.f32.mrf.mxu0
      %v344 = vadd.f32 0.0, %v343
      %345 = vdwg.mxu0
      %v346 = vmax.f32 %v275, 0.0
      %v347 = vmax.f32 %v277, 0.0
      %v348 = vmax.f32 %v328, 0.0
      %v349 = vmax.f32 %v330, 0.0
      %v350 = vmax.f32 %v279, 0.0
      %v351 = vmax.f32 %v281, 0.0
      %v352 = vmax.f32 %v332, 0.0
      %v353 = vmax.f32 %v334, 0.0
      %v354 = vmax.f32 %v285, 0.0
      %v355 = vmax.f32 %v287, 0.0
      %v356 = vmax.f32 %v338, 0.0
      %v357 = vmax.f32 %v340, 0.0
      %v358 = vmax.f32 %v289, 0.0
      %v359 = vmax.f32 %v291, 0.0
      %v360 = vmax.f32 %v342, 0.0
      %v361 = vmax.f32 %v344, 0.0
      %v362 = vpack.c.bf16 %v350, %v346
      %v363 = vpack.c.bf16 %v351, %v347
      %v364 = vpack.c.bf16 %v352, %v348
      %v365 = vpack.c.bf16 %v353, %v349
      %v366 = vpack.c.bf16 %v358, %v354
      %v367 = vpack.c.bf16 %v359, %v355
      %v368 = vpack.c.bf16 %v360, %v356
      %v369 = vpack.c.bf16 %v361, %v357
      %v370 = vld [vmem:[%s2] sm:$0xf]
      %v371 = vld [vmem:[%s2 + $0x4] sm:$0xf]
      %v372 = vld [vmem:[%s2 + $0x8] sm:$0xf]
      %v373 = vld [vmem:[%s2 + $0xc] sm:$0xf]
      %v374 = vld [vmem:[%s2 + $0x10] sm:$0xf]
      %v375 = vld [vmem:[%s2 + $0x14] sm:$0xf]
      %v376 = vld [vmem:[%s2 + $0x18] sm:$0xf]
      %v377 = vld [vmem:[%s2 + $0x1c] sm:$0xf]
      %v378 = vld [vmem:[%s2 + $0x20] sm:$0xf]
      %v379 = vld [vmem:[%s2 + $0x24] sm:$0xf]
      %v380 = vld [vmem:[%s2 + $0x28] sm:$0xf]
      %v381 = vld [vmem:[%s2 + $0x2c] sm:$0xf]
      %v382 = vld [vmem:[%s2 + $0x30] sm:$0xf]
      %v383 = vld [vmem:[%s2 + $0x34] sm:$0xf]
      %v384 = vld [vmem:[%s2 + $0x38] sm:$0xf]
      %v385 = vld [vmem:[%s2 + $0x3c] sm:$0xf]
      %v386 = vld [vmem:[%s2 + $0x40] sm:$0xf]
      %v387 = vld [vmem:[%s2 + $0x44] sm:$0xf]
      %v388 = vld [vmem:[%s2 + $0x48] sm:$0xf]
      %v389 = vld [vmem:[%s2 + $0x4c] sm:$0xf]
      %v390 = vld [vmem:[%s2 + $0x50] sm:$0xf]
      %v391 = vld [vmem:[%s2 + $0x54] sm:$0xf]
      %v392 = vld [vmem:[%s2 + $0x58] sm:$0xf]
      %v393 = vld [vmem:[%s2 + $0x5c] sm:$0xf]
      %v394 = vld [vmem:[%s2 + $0x60] sm:$0xf]
      %v395 = vld [vmem:[%s2 + $0x64] sm:$0xf]
      %v396 = vld [vmem:[%s2 + $0x68] sm:$0xf]
      %v397 = vld [vmem:[%s2 + $0x6c] sm:$0xf]
      %v398 = vld [vmem:[%s2 + $0x70] sm:$0xf]
      %v399 = vld [vmem:[%s2 + $0x74] sm:$0xf]
      %v400 = vld [vmem:[%s2 + $0x78] sm:$0xf]
      %v401 = vld [vmem:[%s2 + $0x7c] sm:$0xf]
      %v402 = vld [vmem:[%s2 + $0x80] sm:$0xf]
      %v403 = vld [vmem:[%s2 + $0x84] sm:$0xf]
      %v404 = vld [vmem:[%s2 + $0x88] sm:$0xf]
      %v405 = vld [vmem:[%s2 + $0x8c] sm:$0xf]
      %v406 = vld [vmem:[%s2 + $0x90] sm:$0xf]
      %v407 = vld [vmem:[%s2 + $0x94] sm:$0xf]
      %v408 = vld [vmem:[%s2 + $0x98] sm:$0xf]
      %v409 = vld [vmem:[%s2 + $0x9c] sm:$0xf]
      %v410 = vld [vmem:[%s2 + $0xa0] sm:$0xf]
      %v411 = vld [vmem:[%s2 + $0xa4] sm:$0xf]
      %v412 = vld [vmem:[%s2 + $0xa8] sm:$0xf]
      %v413 = vld [vmem:[%s2 + $0xac] sm:$0xf]
      %v414 = vld [vmem:[%s2 + $0xb0] sm:$0xf]
      %v415 = vld [vmem:[%s2 + $0xb4] sm:$0xf]
      %v416 = vld [vmem:[%s2 + $0xb8] sm:$0xf]
      %v417 = vld [vmem:[%s2 + $0xbc] sm:$0xf]
      %v418 = vld [vmem:[%s2 + $0xc0] sm:$0xf]
      %v419 = vld [vmem:[%s2 + $0xc4] sm:$0xf]
      %v420 = vld [vmem:[%s2 + $0xc8] sm:$0xf]
      %v421 = vld [vmem:[%s2 + $0xcc] sm:$0xf]
      %v422 = vld [vmem:[%s2 + $0xd0] sm:$0xf]
      %v423 = vld [vmem:[%s2 + $0xd4] sm:$0xf]
      %v424 = vld [vmem:[%s2 + $0xd8] sm:$0xf]
      %v425 = vld [vmem:[%s2 + $0xdc] sm:$0xf]
      %v426 = vld [vmem:[%s2 + $0xe0] sm:$0xf]
      %v427 = vld [vmem:[%s2 + $0xe4] sm:$0xf]
      %v428 = vld [vmem:[%s2 + $0xe8] sm:$0xf]
      %v429 = vld [vmem:[%s2 + $0xec] sm:$0xf]
      %v430 = vld [vmem:[%s2 + $0xf0] sm:$0xf]
      %v431 = vld [vmem:[%s2 + $0xf4] sm:$0xf]
      %v432 = vld [vmem:[%s2 + $0xf8] sm:$0xf]
      %v433 = vld [vmem:[%s2 + $0xfc] sm:$0xf]
      %v434 = vld [vmem:[%s3] sm:$0x1]
      %v436 = vlaneseq
      %v437 = vshrl.u32 %v436, 7
      %v438 = vsub.s32 0, %v437
      %v439 = vrot.slane %v434, %v438
      %v505 = vunpack.c.l.b16 %v370
      %v506 = vunpack.c.l.b16 %v371
      %v507 = vunpack.c.l.b16 %v372
      %v508 = vunpack.c.l.b16 %v373
      %v509 = vunpack.c.l.b16 %v374
      %v510 = vunpack.c.l.b16 %v375
      %v511 = vunpack.c.l.b16 %v376
      %v512 = vunpack.c.l.b16 %v377
      %v513 = vunpack.c.l.b16 %v378
      %v514 = vunpack.c.l.b16 %v379
      %v515 = vunpack.c.l.b16 %v380
      %v516 = vunpack.c.l.b16 %v381
      %v517 = vunpack.c.l.b16 %v382
      %v518 = vunpack.c.l.b16 %v383
      %v519 = vunpack.c.l.b16 %v384
      %v520 = vunpack.c.l.b16 %v385
      %v521 = vunpack.c.l.b16 %v386
      %v522 = vunpack.c.l.b16 %v387
      %v523 = vunpack.c.l.b16 %v388
      %v524 = vunpack.c.l.b16 %v389
      %v525 = vunpack.c.l.b16 %v390
      %v526 = vunpack.c.l.b16 %v391
      %v527 = vunpack.c.l.b16 %v392
      %v528 = vunpack.c.l.b16 %v393
      %v529 = vunpack.c.l.b16 %v394
      %v530 = vunpack.c.l.b16 %v395
      %v531 = vunpack.c.l.b16 %v396
      %v532 = vunpack.c.l.b16 %v397
      %v533 = vunpack.c.l.b16 %v398
      %v534 = vunpack.c.l.b16 %v399
      %v535 = vunpack.c.l.b16 %v400
      %v536 = vunpack.c.l.b16 %v401
      %v537 = vunpack.c.l.b16 %v402
      %v538 = vunpack.c.l.b16 %v403
      %v539 = vunpack.c.l.b16 %v404
      %v540 = vunpack.c.l.b16 %v405
      %v541 = vunpack.c.l.b16 %v406
      %v542 = vunpack.c.l.b16 %v407
      %v543 = vunpack.c.l.b16 %v408
      %v544 = vunpack.c.l.b16 %v409
      %v545 = vunpack.c.l.b16 %v410
      %v546 = vunpack.c.l.b16 %v411
      %v547 = vunpack.c.l.b16 %v412
      %v548 = vunpack.c.l.b16 %v413
      %v549 = vunpack.c.l.b16 %v414
      %v550 = vunpack.c.l.b16 %v415
      %v551 = vunpack.c.l.b16 %v416
      %v552 = vunpack.c.l.b16 %v417
      %v553 = vunpack.c.l.b16 %v418
      %v554 = vunpack.c.l.b16 %v419
      %v555 = vunpack.c.l.b16 %v420
      %v556 = vunpack.c.l.b16 %v421
      %v557 = vunpack.c.l.b16 %v422
      %v558 = vunpack.c.l.b16 %v423
      %v559 = vunpack.c.l.b16 %v424
      %v560 = vunpack.c.l.b16 %v425
      %v561 = vunpack.c.l.b16 %v426
      %v562 = vunpack.c.l.b16 %v427
      %v563 = vunpack.c.l.b16 %v428
      %v564 = vunpack.c.l.b16 %v429
      %v565 = vunpack.c.l.b16 %v430
      %v566 = vunpack.c.l.b16 %v431
      %v567 = vunpack.c.l.b16 %v432
      %v568 = vunpack.c.l.b16 %v433
      %v569 = vpack.c.b16 %v506, %v505
      %v570 = vpack.c.b16 %v508, %v507
      %v571 = vpack.c.b16 %v510, %v509
      %v572 = vpack.c.b16 %v512, %v511
      %v573 = vpack.c.b16 %v514, %v513
      %v574 = vpack.c.b16 %v516, %v515
      %v575 = vpack.c.b16 %v518, %v517
      %v576 = vpack.c.b16 %v520, %v519
      %v577 = vpack.c.b16 %v522, %v521
      %v578 = vpack.c.b16 %v524, %v523
      %v579 = vpack.c.b16 %v526, %v525
      %v580 = vpack.c.b16 %v528, %v527
      %v581 = vpack.c.b16 %v530, %v529
      %v582 = vpack.c.b16 %v532, %v531
      %v583 = vpack.c.b16 %v534, %v533
      %v584 = vpack.c.b16 %v536, %v535
      %v585 = vpack.c.b16 %v538, %v537
      %v586 = vpack.c.b16 %v540, %v539
      %v587 = vpack.c.b16 %v542, %v541
      %v588 = vpack.c.b16 %v544, %v543
      %v589 = vpack.c.b16 %v546, %v545
      %v590 = vpack.c.b16 %v548, %v547
      %v591 = vpack.c.b16 %v550, %v549
      %v592 = vpack.c.b16 %v552, %v551
      %v593 = vpack.c.b16 %v554, %v553
      %v594 = vpack.c.b16 %v556, %v555
      %v595 = vpack.c.b16 %v558, %v557
      %v596 = vpack.c.b16 %v560, %v559
      %v597 = vpack.c.b16 %v562, %v561
      %v598 = vpack.c.b16 %v564, %v563
      %v599 = vpack.c.b16 %v566, %v565
      %v600 = vpack.c.b16 %v568, %v567
      %633 = vmatprep.subr.bf16.mxu0 0
      %634 = vmatpush1.bf16.msra.mxu0 %v576
      %635 = vmatprep.subr.bf16.mxu0 0
      %636 = vmatpush1.bf16.msra.mxu0 %v575
      %637 = vmatprep.subr.bf16.mxu0 0
      %638 = vmatpush1.bf16.msra.mxu0 %v574
      %639 = vmatprep.subr.bf16.mxu0 0
      %640 = vmatpush1.bf16.msra.mxu0 %v573
      %641 = vmatprep.subr.bf16.mxu0 0
      %642 = vmatpush1.bf16.msra.mxu0 %v572
      %643 = vmatprep.subr.bf16.mxu0 0
      %644 = vmatpush1.bf16.msra.mxu0 %v571
      %645 = vmatprep.subr.bf16.mxu0 0
      %646 = vmatpush1.bf16.msra.mxu0 %v570
      %647 = vmatprep.subr.bf16.mxu0 0
      %648 = vmatpush1.bf16.msra.mxu0 %v569
      %649 = vmatprep.subr.bf16.mxu0 0
      %650 = vmatpush2.bf16.msra.mxu0 %v584
      %651 = vmatprep.subr.bf16.mxu0 0
      %652 = vmatpush2.bf16.msra.mxu0 %v583
      %653 = vmatprep.subr.bf16.mxu0 0
      %654 = vmatpush2.bf16.msra.mxu0 %v582
      %655 = vmatprep.subr.bf16.mxu0 0
      %656 = vmatpush2.bf16.msra.mxu0 %v581
      %657 = vmatprep.subr.bf16.mxu0 0
      %658 = vmatpush2.bf16.msra.mxu0 %v580
      %659 = vmatprep.subr.bf16.mxu0 0
      %660 = vmatpush2.bf16.msra.mxu0 %v579
      %661 = vmatprep.subr.bf16.mxu0 0
      %662 = vmatpush2.bf16.msra.mxu0 %v578
      %663 = vmatprep.subr.bf16.mxu0 0
      %664 = vmatpush2.bf16.msra.mxu0 %v577
      %665 = vmatprep.mubr.bf16.mxu0 %v363
      %666 = vmatmul.mubr.bf16.gmra.mxu0 %v362
      %v667 = vpop.f32.mrf.mxu0
      %v668 = vadd.f32 %v439, %v667
      %v669 = vpop.f32.mrf.mxu0
      %v670 = vpop.f32.mrf.mxu0
      %v671 = vadd.f32 %v439, %v670
      %v672 = vpop.f32.mrf.mxu0
      %673 = vmatprep.mubr.bf16.mxu0 %v367
      %674 = vmatmul.mubr.bf16.gmra.mxu0 %v366
      %v675 = vpop.f32.mrf.mxu0
      %v676 = vadd.f32 %v439, %v675
      %v677 = vpop.f32.mrf.mxu0
      %v678 = vpop.f32.mrf.mxu0
      %v679 = vadd.f32 %v439, %v678
      %v680 = vpop.f32.mrf.mxu0
      %681 = vdwg.mxu0
      %682 = vmatprep.subr.bf16.mxu0 0
      %683 = vmatpush1.bf16.msra.mxu0 %v592
      %684 = vmatprep.subr.bf16.mxu0 0
      %685 = vmatpush1.bf16.msra.mxu0 %v591
      %686 = vmatprep.subr.bf16.mxu0 0
      %687 = vmatpush1.bf16.msra.mxu0 %v590
      %688 = vmatprep.subr.bf16.mxu0 0
      %689 = vmatpush1.bf16.msra.mxu0 %v589
      %690 = vmatprep.subr.bf16.mxu0 0
      %691 = vmatpush1.bf16.msra.mxu0 %v588
      %692 = vmatprep.subr.bf16.mxu0 0
      %693 = vmatpush1.bf16.msra.mxu0 %v587
      %694 = vmatprep.subr.bf16.mxu0 0
      %695 = vmatpush1.bf16.msra.mxu0 %v586
      %696 = vmatprep.subr.bf16.mxu0 0
      %697 = vmatpush1.bf16.msra.mxu0 %v585
      %698 = vmatprep.subr.bf16.mxu0 0
      %699 = vmatpush2.bf16.msra.mxu0 %v600
      %700 = vmatprep.subr.bf16.mxu0 0
      %701 = vmatpush2.bf16.msra.mxu0 %v599
      %702 = vmatprep.subr.bf16.mxu0 0
      %703 = vmatpush2.bf16.msra.mxu0 %v598
      %704 = vmatprep.subr.bf16.mxu0 0
      %705 = vmatpush2.bf16.msra.mxu0 %v597
      %706 = vmatprep.subr.bf16.mxu0 0
      %707 = vmatpush2.bf16.msra.mxu0 %v596
      %708 = vmatprep.subr.bf16.mxu0 0
      %709 = vmatpush2.bf16.msra.mxu0 %v595
      %710 = vmatprep.subr.bf16.mxu0 0
      %711 = vmatpush2.bf16.msra.mxu0 %v594
      %712 = vmatprep.subr.bf16.mxu0 0
      %713 = vmatpush2.bf16.msra.mxu0 %v593
      %714 = vmatprep.mubr.bf16.mxu0 %v365
      %715 = vmatmul.mubr.bf16.gmra.mxu0 %v364
      %v716 = vpop.f32.mrf.mxu0
      %v717 = vadd.f32 %v668, %v716
      %v718 = vpop.f32.mrf.mxu0
      %v719 = vpop.f32.mrf.mxu0
      %v720 = vadd.f32 %v671, %v719
      %v721 = vpop.f32.mrf.mxu0
      %722 = vmatprep.mubr.bf16.mxu0 %v369
      %723 = vmatmul.mubr.bf16.gmra.mxu0 %v368
      %v724 = vpop.f32.mrf.mxu0
      %v725 = vadd.f32 %v676, %v724
      %v726 = vpop.f32.mrf.mxu0
      %v727 = vpop.f32.mrf.mxu0
      %v728 = vadd.f32 %v679, %v727
      %v729 = vpop.f32.mrf.mxu0
      %730 = vdwg.mxu0
      %731 = vst.msk [vmem:[%s199] sm:$0xff] %vm220, %v717
      %732 = vst.msk [vmem:[%s199 + $0x8] sm:$0xff] %vm220, %v720
      %733 = vst.msk [vmem:[%s199 + $0x10] sm:$0xff] %vm220, %v725
      %734 = vst.msk [vmem:[%s199 + $0x18] sm:$0xff] %vm220, %v728
      %s735 = smul.u32 4, %s15
      %p736 = scmp.lt.s32.totalorder %s735, 7
      %s737 = scalar_select %p736, %s735, 7
      %s738 = smul.addr %s737, 8
      %s739 = scalar_lea.vmem %s4, %s738
      // Predicated region
      $region37: #{net_forward.1} parent=35 // pred_check
        %p740 = pneg %p122
      $region38: #{net_forward.1} parent=35 // pred_check_branch
        %742 = sbr.rel (%p740) target = $region40
      $region39: #{net_forward.1} parent=35 // pred_region
        %s743 = smul.u32 4, %s15
      $region40: #{net_forward.1} parent=35 // pred_fallthru
        _
    $region36: #{net_forward.1} parent=5 // pred_fallthru
      _
    %p744 = scmp.le.s32.totalorder 2, %s10
    // Predicated region
    $region41: #{net_forward.1} parent=5 // pred_check
      %p745 = pneg %p744
    $region42: #{net_forward.1} parent=5 // pred_check_branch
      %747 = sbr.rel (%p745) target = $region44
    $region43: #{net_forward.1} parent=5 // pred_region
      %s748 = ssub.s32 %s10, 2
      // Predicated region
      $region45: #{net_forward.1} parent=43 // pred_check
        %p749 = pneg %p128
      $region46: #{net_forward.1} parent=43 // pred_check_branch
        %751 = sbr.rel (%p749) target = $region48
      $region47: #{net_forward.1} parent=43 // pred_region
        %s752 = smul.u32 4, %s16
        %p753 = scmp.lt.s32.totalorder %s752, 7
        %s754 = scalar_select %p753, %s752, 7
        %s755 = smul.addr %s754, 8
        %s756 = scalar_lea.vmem %s4, %s755
      $region48: #{net_forward.1} parent=43 // pred_fallthru
        _
    $region44: #{net_forward.1} parent=5 // pred_fallthru
      _
  $region6: #{net_forward.1} parent=0 // loop_footer
    %s14 = sadd.s32 1, %s10
  $region7: #{net_forward.1} parent=0 // loop_footer_branch
    %9 = sbr.rel target = $region3
  $region8: #{net_forward.1} parent=0 // loop_exit
    _

</llo_original>
